<compile_context>
chip_gen: v6e
topology: v6e:2x2x1
jax: 0.10.0
libtpu: 0.0.40
codegen_flags: <defaults>
</compile_context>

<pallas_src>
import math
import functools

import jax
import jax.numpy as jnp
from jax.experimental import pallas as pl
from jax.experimental.pallas import tpu as pltpu


def _round_up(v, m):
    return ((v + m - 1) // m) * m


# ----------------------------- kernels --------------------------------------
def _backbone_neck_kernel(x_ref, w_ref, emb_ref, acc_ref, *, inv_hw):
    # x_ref: [B, Cin, THW] (one HW tile), w_ref: [Cin, Cf],
    # emb_ref: [1, B, Cf] (one partial-embedding slot per parallel HW split).
    t = pl.program_id(1)

    @pl.when(t == 0)
    def _():
        acc_ref[...] = jnp.zeros_like(acc_ref)

    # running spatial sum (AdaptiveAvgPool2d numerator); padded columns are 0.
    acc_ref[...] += jnp.sum(x_ref[...], axis=-1)            # [B, Cin]

    @pl.when(t == pl.num_programs(1) - 1)
    def _():
        pooled = acc_ref[...] * inv_hw                       # partial mean
        # TODO(synk): the timm pretrained backbone has no Pallas equivalent;
        # this 1x1-conv stand-in (fused with AdaptiveAvgPool2d by linearity)
        # replaces it.
        emb_ref[0] = jnp.dot(pooled, w_ref[...],
                             preferred_element_type=jnp.float32)


def _head_kernel(emb_ref, wh_ref, bh_ref, logits_ref):
    # labels is None -> classification head only (nn.Dropout identity in eval).
    w = wh_ref[...].astype(jnp.float32)                      # bf16 stream -> f32
    logits_ref[...] = (jnp.dot(emb_ref[...], w,
                               preferred_element_type=jnp.float32)
                       + bh_ref[...])


def _head_arcface_kernel(emb_ref, invx_ref, wc_ref, bh_ref, invw_ref, lab_ref,
                         logits_ref, arc_ref, *, s, cos_m, sin_m, th, mm,
                         tile_n):
    # emb_ref: [B, C] f32 (resident), invx_ref: [B, 1] = 1/||emb|| (hoisted),
    # wc_ref:  [C, 2*TN] bf16 (interleaved head|arc tile), bh/invw: [1, TN],
    # lab_ref: [B, 1] int32.
    emb = emb_ref[...]
    w = wc_ref[...].astype(jnp.float32)                      # bf16 stream -> f32
    res = jnp.dot(emb, w, preferred_element_type=jnp.float32)      # [B, 2*TN]

    # ---- classification head (nn.Dropout identity in eval mode) ----
    logits_ref[...] = res[:, :tile_n] + bh_ref[...]

    # ---- ArcFace: F.normalize folded into post-matmul scaling ----
    cos_theta = jnp.clip(res[:, tile_n:] * invx_ref[...] * invw_ref[...],
                         -1.0, 1.0)
    sin_theta = jnp.sqrt(jnp.maximum(1.0 - cos_theta * cos_theta, 0.0))
    cos_theta_m = cos_theta * cos_m - sin_theta * sin_m
    # Matches the module as written: easy_margin only changes `th`; the
    # fallback branch always subtracts mm.
    cos_theta_m = jnp.where(cos_theta > th, cos_theta_m, cos_theta - mm)

    # one_hot.scatter_(1, labels, 1) -> per-tile iota compare with class offset
    b_sz, tn = cos_theta.shape
    col = (jax.lax.broadcasted_iota(jnp.int32, (b_sz, tn), 1)
           + pl.program_id(0) * tile_n)
    one_hot = (col == lab_ref[...]).astype(jnp.float32)
    arc_ref[...] = (one_hot * cos_theta_m + (1.0 - one_hot) * cos_theta) * s


# ----------------------------- one-time weight prep --------------------------
def prepare_arcface_params(params, *, tile_n=256, weights_dtype=jnp.bfloat16):
    """One-time preparation of the static inference weights (cache the result):
    pad classes to a lane-dense multiple of tile_n, pre-transpose to [C, N],
    interleave head/arc tiles into one [C, 2*N_pad] matrix, cast to bf16, and
    precompute per-class 1/||w_arc||."""
    w_head, b_head, w_arc = params["w_head"], params["b_head"], params["w_arc"]
    n_cls, c_feat = w_head.shape
    n_pad = pl.cdiv(n_cls, tile_n) * tile_n
    pad = n_pad - n_cls
    eps = 1e-12

    wh = jnp.pad(w_head, ((0, pad), (0, 0))).astype(weights_dtype)
    wa = jnp.pad(w_arc, ((0, pad), (0, 0))).astype(weights_dtype)
    bh = jnp.pad(b_head, (0, pad)).astype(jnp.float32).reshape(1, n_pad)
    inv_w = jax.lax.rsqrt(jnp.maximum(
        jnp.sum(wa.astype(jnp.float32) ** 2, axis=-1), eps * eps)
    ).reshape(1, n_pad)

    nt = n_pad // tile_n
    wh_t = wh.T.reshape(c_feat, nt, tile_n)
    wa_t = wa.T.reshape(c_feat, nt, tile_n)
    # tile n occupies columns [2*n*tile_n, 2*(n+1)*tile_n): [head_tile|arc_tile]
    w_comb = jnp.stack([wh_t, wa_t], axis=2).reshape(c_feat, 2 * n_pad)

    return {"w_bb": params["w_bb"], "w_comb": w_comb, "b_head": bh,
            "inv_w": inv_w, "n_classes": n_cls, "n_pad": n_pad,
            "tile_n": tile_n}


# ----------------------------- wrappers -------------------------------------
def backbone_neck(x, w_bb, *, tile_hw=2048, n_split=2):
    """Fused backbone stand-in + neck. x: [B, Cin, H, W] -> emb [B, Cf]."""
    B, Cin, H, W = x.shape
    HW = H * W
    Cf = w_bb.shape[1]
    x_flat = x.reshape(B, Cin, HW)

    thw = min(tile_hw, _round_up(HW, 128))      # lane-aligned HW tile
    hw_pad = _round_up(HW, thw)
    if hw_pad != HW:                            # zero-pad: contributes 0 to sum
        x_flat = jnp.pad(x_flat, ((0, 0), (0, 0), (0, hw_pad - HW)))
    n_tiles = hw_pad // thw
    n_par = n_split if (n_tiles % n_split == 0 and n_tiles >= n_split) else 1
    tpp = n_tiles // n_par                      # HW tiles per parallel split

    kernel = functools.partial(_backbone_neck_kernel, inv_hw=1.0 / HW)
    emb_parts = pl.pallas_call(
        kernel,
        out_shape=jax.ShapeDtypeStruct((n_par, B, Cf), jnp.float32),
        grid=(n_par, tpp),
        in_specs=[pl.BlockSpec((B, Cin, thw), lambda p, t: (0, 0, p * tpp + t)),
                  pl.BlockSpec((Cin, Cf), lambda p, t: (0, 0))],
        out_specs=pl.BlockSpec((1, B, Cf), lambda p, t: (p, 0, 0)),
        scratch_shapes=[pltpu.VMEM((B, Cin), jnp.float32)],
        compiler_params=pltpu.CompilerParams(
            dimension_semantics=("parallel", "arbitrary"),
            vmem_limit_bytes=32 * 1024 * 1024),
        cost_estimate=pl.CostEstimate(
            flops=2 * B * Cin * hw_pad + 2 * n_par * B * Cin * Cf,
            transcendentals=0,
            bytes_accessed=4 * (B * Cin * hw_pad + Cin * Cf + n_par * B * Cf)),
    )(x_flat, w_bb)
    # combine partial spatial means from the parallel HW splits (tiny op)
    return emb_parts.sum(axis=0)


def head_logits(emb, prep):
    """Linear head only (labels is None path): streams only the head halves."""
    B, C = emb.shape
    n_pad, tile_n, n_cls = prep["n_pad"], prep["tile_n"], prep["n_classes"]
    nt = n_pad // tile_n
    logits = pl.pallas_call(
        _head_kernel,
        out_shape=jax.ShapeDtypeStruct((B, n_pad), jnp.float32),
        grid=(nt,),
        in_specs=[pl.BlockSpec((B, C), lambda n: (0, 0)),
                  pl.BlockSpec((C, tile_n), lambda n: (0, 2 * n)),  # head half
                  pl.BlockSpec((1, tile_n), lambda n: (0, n))],
        out_specs=pl.BlockSpec((B, tile_n), lambda n: (0, n)),
        compiler_params=pltpu.CompilerParams(
            dimension_semantics=("parallel",),
            vmem_limit_bytes=32 * 1024 * 1024),
        cost_estimate=pl.CostEstimate(
            flops=2 * B * C * n_pad, transcendentals=0,
            bytes_accessed=2 * C * n_pad + 4 * (B * C + B * n_pad + n_pad)),
    )(emb, prep["w_comb"], prep["b_head"])
    return logits[:, :n_cls]


def head_and_arcface(emb, inv_x, prep, labels, *, s=30.0, m=0.5,
                     easy_margin=False):
    B, C = emb.shape
    n_pad, tile_n, n_cls = prep["n_pad"], prep["tile_n"], prep["n_classes"]
    nt = n_pad // tile_n

    cos_m = math.cos(m)
    sin_m = math.sin(m)
    th = 0.0 if easy_margin else math.cos(math.pi - m)
    mm = math.sin(math.pi - m) * m
    kernel = functools.partial(_head_arcface_kernel, s=s, cos_m=cos_m,
                               sin_m=sin_m, th=th, mm=mm, tile_n=tile_n)
    logits, arc = pl.pallas_call(
        kernel,
        out_shape=(jax.ShapeDtypeStruct((B, n_pad), jnp.float32),
                   jax.ShapeDtypeStruct((B, n_pad), jnp.float32)),
        grid=(nt,),
        in_specs=[pl.BlockSpec((B, C), lambda n: (0, 0)),        # emb (resident)
                  pl.BlockSpec((B, 1), lambda n: (0, 0)),        # 1/||emb||
                  pl.BlockSpec((C, 2 * tile_n), lambda n: (0, n)),  # combined W
                  pl.BlockSpec((1, tile_n), lambda n: (0, n)),   # b_head tile
                  pl.BlockSpec((1, tile_n), lambda n: (0, n)),   # 1/||w_arc||
                  pl.BlockSpec((B, 1), lambda n: (0, 0))],       # labels
        out_specs=(pl.BlockSpec((B, tile_n), lambda n: (0, n)),
                   pl.BlockSpec((B, tile_n), lambda n: (0, n))),
        compiler_params=pltpu.CompilerParams(
            dimension_semantics=("parallel",),
            vmem_limit_bytes=32 * 1024 * 1024),
        cost_estimate=pl.CostEstimate(
            flops=2 * B * C * 2 * n_pad,
            transcendentals=B * n_pad,
            bytes_accessed=2 * (2 * C * n_pad)
                           + 4 * (B * C + 2 * B * n_pad + 2 * n_pad + 2 * B)),
    )(emb, inv_x, prep["w_comb"], prep["b_head"], prep["inv_w"],
      labels.reshape(B, 1).astype(jnp.int32))
    return logits[:, :n_cls], arc[:, :n_cls]


def arcface_model_forward(x, prep, labels=None, return_embedding=False,
                          s=30.0, m=0.5, easy_margin=False, tile_hw=2048):
    """x: NCHW float32 [B, Cin, H, W] (PyTorch convention).
    `prep` is the cached output of prepare_arcface_params()."""
    emb = backbone_neck(x, prep["w_bb"], tile_hw=tile_hw)    # [B, C_feat] f32
    if return_embedding:
        return emb
    if labels is None:
        return head_logits(emb, prep)
    eps = 1e-12
    # 1/||emb|| hoisted out of the class-tiled kernel (tiny [B,C] reduction).
    inv_x = jax.lax.rsqrt(jnp.maximum(
        jnp.sum(emb * emb, axis=-1, keepdims=True), eps * eps))
    return head_and_arcface(emb, inv_x, prep, labels,
                            s=s, m=m, easy_margin=easy_margin)


# ----------------------------- reference (pure JAX, for sanity) -------------
def _reference(x, params, labels, s=30.0, m=0.5, weights_dtype=jnp.bfloat16):
    B, Cin, H, W = x.shape
    x_flat = jnp.transpose(x, (0, 2, 3, 1)).reshape(B, H * W, Cin)
    feats = x_flat @ params["w_bb"]                          # per-pixel 1x1 conv
    emb = jnp.mean(feats, axis=1)                            # pool + flatten
    # simulate the bf16 weight storage used by the kernels
    wh = params["w_head"].astype(weights_dtype).astype(jnp.float32)
    wa = params["w_arc"].astype(weights_dtype).astype(jnp.float32)
    logits = emb @ wh.T + params["b_head"]
    eps = 1e-12
    x_n = emb / jnp.maximum(jnp.linalg.norm(emb, axis=-1, keepdims=True), eps)
    w_n = wa / jnp.maximum(jnp.linalg.norm(wa, axis=-1, keepdims=True), eps)
    cos = jnp.clip(x_n @ w_n.T, -1.0, 1.0)
    sin = jnp.sqrt(jnp.maximum(1.0 - cos * cos, 0.0))
    cos_m_v = cos * math.cos(m) - sin * math.sin(m)
    cos_m_v = jnp.where(cos > math.cos(math.pi - m), cos_m_v,
                        cos - math.sin(math.pi - m) * m)
    oh = jax.nn.one_hot(labels, cos.shape[1], dtype=jnp.float32)
    arc = (oh * cos_m_v + (1.0 - oh) * cos) * s
    return logits, arc, emb


# ----------------------------- main ------------------------------------------
if __name__ == "__main__":
    B, Cin, H, W = 2, 3, 16, 16
    C_FEAT, N_CLS = 128, 300          # padded to 512 internally (2 tiles of 256)

    key = jax.random.PRNGKey(0)
    k1, k2, k3, k4, k5 = jax.random.split(key, 5)

    lim_h = 1.0 / math.sqrt(C_FEAT)            # PyTorch Linear default init
    lim_a = math.sqrt(6.0 / (C_FEAT + N_CLS))  # xavier_uniform_
    params = {
        "w_bb": jax.random.normal(k1, (Cin, C_FEAT), jnp.float32) * 0.1,
        "w_head": jax.random.uniform(k2, (N_CLS, C_FEAT), jnp.float32,
                                     -lim_h, lim_h),
        "b_head": jax.random.uniform(k3, (N_CLS,), jnp.float32, -lim_h, lim_h),
        "w_arc": jax.random.uniform(k4, (N_CLS, C_FEAT), jnp.float32,
                                    -lim_a, lim_a),
    }
    # One-time weight preparation (cached across forward calls in a real model).
    prep = prepare_arcface_params(params)
    jax.block_until_ready(prep["w_comb"])

    x = jax.random.normal(k5, (B, Cin, H, W), jnp.float32)
    labels = jnp.array([3, 257], dtype=jnp.int32)   # second label in class tile 1

    logits, arc = arcface_model_forward(x, prep, labels=labels)
    jax.block_until_ready((logits, arc))

    ref_logits, ref_arc, ref_emb = _reference(x, params, labels)
    assert logits.shape == (B, N_CLS) and arc.shape == (B, N_CLS)
    assert jnp.allclose(logits, ref_logits, atol=1e-3, rtol=1e-3)
    assert jnp.allclose(arc, ref_arc, atol=2e-3, rtol=1e-3)

    # labels=None -> logits-only kernel path (streams only head weight halves)
    logits_only = arcface_model_forward(x, prep, labels=None)
    jax.block_until_ready(logits_only)
    assert jnp.allclose(logits_only, ref_logits, atol=1e-3, rtol=1e-3)

    # return_embedding path
    emb = arcface_model_forward(x, prep, return_embedding=True)
    jax.block_until_ready(emb)
    assert jnp.allclose(emb, ref_emb, atol=2e-4, rtol=1e-3)

    # exercise the multi-tile / dual-TensorCore backbone path (small HW tiles)
    emb_mt = backbone_neck(x, params["w_bb"], tile_hw=128)
    jax.block_until_ready(emb_mt)
    assert jnp.allclose(emb_mt, ref_emb, atol=2e-4, rtol=1e-3)

    # exercise the non-divisible-HW (zero-padded spatial) path
    x_odd = x[:, :, :, :15]                         # H*W = 240 -> padded to 256
    emb_odd = backbone_neck(x_odd, params["w_bb"])
    ref_emb_odd = jnp.mean(
        jnp.transpose(x_odd, (0, 2, 3, 1)).reshape(B, -1, Cin) @ params["w_bb"],
        axis=1)
    jax.block_until_ready(emb_odd)
    assert jnp.allclose(emb_odd, ref_emb_odd, atol=2e-4, rtol=1e-3)

    print("KERNEL_OK")
</pallas_src>

<mosaic_0001>
module attributes {stable_mosaic.version = 11 : i64} {
  func.func @_backbone_neck_kernel(%arg0: i32, %arg1: i32, %arg2: memref<2x3x256xf32, #tpu.memory_space<vmem>>, %arg3: memref<3x128xf32, #tpu.memory_space<vmem>>, %arg4: memref<1x2x128xf32, #tpu.memory_space<vmem>>, %arg5: memref<2x3xf32, #tpu.memory_space<vmem>>) attributes {dimension_semantics = [#tpu.dimension_semantics<parallel>, #tpu.dimension_semantics<arbitrary>], iteration_bounds = array<i64: 1, 1>, scalar_prefetch = 0 : i64, scratch_operands = 1 : i64, tpu.core_type = #tpu.core_type<tc>, window_params = [{transform_indices = @transform_0, window_bounds = array<i64: 2, 3, 256>}, {pipeline_mode = #tpu.pipeline_mode<synchronous>, transform_indices = @transform_1, window_bounds = array<i64: 3, 128>}, {transform_indices = @transform_2, window_bounds = array<i64: 1, 2, 128>}]} {
    %c0_i32 = arith.constant 0 : i32
    %0 = arith.cmpi eq, %arg1, %c0_i32 : i32
    %1 = arith.extui %0 : i1 to i32
    %c0_i32_0 = arith.constant 0 : i32
    %2 = arith.cmpi ne, %1, %c0_i32_0 : i32
    scf.if %2 {
      %cst_9 = arith.constant 0.000000e+00 : f32
      %11 = vector.broadcast %cst_9 : f32 to vector<2x3xf32>
      %c0_10 = arith.constant 0 : index
      %c0_11 = arith.constant 0 : index
      %12 = vector.load %arg5[%c0_10, %c0_11] : memref<2x3xf32, #tpu.memory_space<vmem>>, vector<2x3xf32>
      tpu.vector_store %arg5[%c0_10, %c0_11], %11 {strides = array<i32>} : memref<2x3xf32, #tpu.memory_space<vmem>>, vector<2x3xf32>,
    } else {
    }
    %c0 = arith.constant 0 : index
    %c0_1 = arith.constant 0 : index
    %3 = vector.load %arg5[%c0, %c0_1] : memref<2x3xf32, #tpu.memory_space<vmem>>, vector<2x3xf32>
    %c0_2 = arith.constant 0 : index
    %c0_3 = arith.constant 0 : index
    %c0_4 = arith.constant 0 : index
    %4 = vector.load %arg2[%c0_2, %c0_3, %c0_4] : memref<2x3x256xf32, #tpu.memory_space<vmem>>, vector<2x3x256xf32>
    %cst = arith.constant dense<0.000000e+00> : vector<2x3xf32>
    %5 = vector.multi_reduction <add>, %4, %cst [2] : vector<2x3x256xf32> to vector<2x3xf32>
    %6 = arith.addf %3, %5 : vector<2x3xf32>
    %c0_5 = arith.constant 0 : index
    %c0_6 = arith.constant 0 : index
    %7 = vector.load %arg5[%c0_5, %c0_6] : memref<2x3xf32, #tpu.memory_space<vmem>>, vector<2x3xf32>
    tpu.vector_store %arg5[%c0_5, %c0_6], %6 {strides = array<i32>} : memref<2x3xf32, #tpu.memory_space<vmem>>, vector<2x3xf32>,
    %c0_i32_7 = arith.constant 0 : i32
    %8 = arith.cmpi eq, %arg1, %c0_i32_7 : i32
    %9 = arith.extui %8 : i1 to i32
    %c0_i32_8 = arith.constant 0 : i32
    %10 = arith.cmpi ne, %9, %c0_i32_8 : i32
    scf.if %10 {
      %c0_9 = arith.constant 0 : index
      %c0_10 = arith.constant 0 : index
      %11 = vector.load %arg5[%c0_9, %c0_10] : memref<2x3xf32, #tpu.memory_space<vmem>>, vector<2x3xf32>
      %cst_11 = arith.constant 3.906250e-03 : f32
      %12 = vector.broadcast %cst_11 : f32 to vector<2x3xf32>
      %13 = arith.mulf %11, %12 : vector<2x3xf32>
      %c0_12 = arith.constant 0 : index
      %c0_13 = arith.constant 0 : index
      %14 = vector.load %arg3[%c0_12, %c0_13] : memref<3x128xf32, #tpu.memory_space<vmem>>, vector<3x128xf32>
      %cst_14 = arith.constant dense<0.000000e+00> : vector<2x128xf32>
      %15 = tpu.matmul %13, %14, %cst_14 {dimension_numbers = #tpu.dot_dimension_numbers<[1], [0], [0], [1], [0, 0, 1, 1], [], []>} : vector<2x3xf32>, vector<3x128xf32>, vector<2x128xf32> -> vector<2x128xf32>
      %c0_15 = arith.constant 0 : index
      %c0_16 = arith.constant 0 : index
      %c0_17 = arith.constant 0 : index
      %16 = vector.load %arg4[%c0_15, %c0_16, %c0_17] : memref<1x2x128xf32, #tpu.memory_space<vmem>>, vector<1x2x128xf32>
      %17 = vector.shape_cast %16 : vector<1x2x128xf32> to vector<2x128xf32>
      %18 = vector.shape_cast %15 : vector<2x128xf32> to vector<1x2x128xf32>
      tpu.vector_store %arg4[%c0_15, %c0_16, %c0_17], %18 {strides = array<i32>} : memref<1x2x128xf32, #tpu.memory_space<vmem>>, vector<1x2x128xf32>,
    } else {
    }
    return
  }
  func.func @transform_0(%arg0: i32, %arg1: i32) -> (i32, i32, i32) {
    %c1_i32 = arith.constant 1 : i32
    %0 = arith.muli %arg0, %c1_i32 : i32
    %1 = arith.addi %0, %arg1 : i32
    %c0_i32 = arith.constant 0 : i32
    %c0_i32_0 = arith.constant 0 : i32
    %c0_i32_1 = arith.constant 0 : i32
    return %c0_i32, %c0_i32_0, %1 : i32, i32, i32
  }
  func.func @transform_1(%arg0: i32, %arg1: i32) -> (i32, i32) {
    %c0_i32 = arith.constant 0 : i32
    %c0_i32_0 = arith.constant 0 : i32
    %c0_i32_1 = arith.constant 0 : i32
    return %c0_i32, %c0_i32_0 : i32, i32
  }
  func.func @transform_2(%arg0: i32, %arg1: i32) -> (i32, i32, i32) {
    %c0_i32 = arith.constant 0 : i32
    %c0_i32_0 = arith.constant 0 : i32
    %c0_i32_1 = arith.constant 0 : i32
    return %arg0, %c0_i32, %c0_i32_0 : i32, i32, i32
  }
}

</mosaic_0001>

<llo_original>
// kernel: tpu_custom_call.1
$region0: #{tpu_custom_call.1}
  #allocation0 [shape = 'u32[]', space=smem, size = 0x4, offset = 0x4, fixed_abs, tag = 'smem constant byte address 0x4 - core index']
  #allocation1 [shape = 'u32[144,128]{1,0:T(1,128)}', space=vmem, size = 0x12000, scoped, tag = 'internal scratch']
  #allocation2 [shape = 'f32[2,3]{1,0:T(2,128)}', space=vmem, size = 0x400, scoped, tag = 'scratch operand']
  %s0 = inlined_call_operand.vmem [shape: f32[2,3,256], index: 0, kind: input, shape index: {}]
  %s1 = inlined_call_operand.vmem [shape: f32[3,128], index: 1, kind: input, shape index: {}]
  %s2 = inlined_call_operand.hbm [shape: f32[1,2,128], index: 2, kind: output, shape index: {}]
  %s3 = sld [smem:[#allocation0]]
  $region26: #{tpu_custom_call.1} parent=0
    _
  %s5 = ssub.s32 1, %s3
  %s6 = scalar_select 0, %s5, %s3
  $region1: #{tpu_custom_call.1} parent=0
    #allocation3 [shape = 'u8[1024]{0}', space=vmem, size = 0x400, scoped, tag = 'output window, operand 0, single buffered']
    #allocation4 [shape = 's32[1]{0}', space=sflag, size = 0x4, scoped, tag = 'scoped memory for tpu_custom_call.1']
    %7 = vsyncpa [#allocation4], 0
    // Predicated region
    $region2: #{tpu_custom_call.1} parent=1 // pred_check
      _
    $region3: #{tpu_custom_call.1} parent=1 // pred_check_branch
      %9 = sbr.rel (0) target = $region5
    $region4: #{tpu_custom_call.1} parent=1 // pred_region
      %s10 = sadd.s32 0, 0
      %s11 = smul.u32 2, %s10
      %p12 = scmp.lt.s32.totalorder %s11, 1
      %s13 = scalar_select %p12, %s11, 1
      %s14 = smul.addr %s13, 4
      %s15 = scalar_lea.vmem %s0, %s14
      %s16 = sadd.s32 0, 0
      %s17 = smul.u32 2, %s16
    $region5: #{tpu_custom_call.1} parent=1 // pred_fallthru
      _
    // Predicated region
    $region6: #{tpu_custom_call.1} parent=1 // pred_check
      _
    $region7: #{tpu_custom_call.1} parent=1 // pred_check_branch
      %19 = sbr.rel (0) target = $region9
    $region8: #{tpu_custom_call.1} parent=1 // pred_region
      _
    $region9: #{tpu_custom_call.1} parent=1 // pred_fallthru
      _
    %s20 = sadd.s32 0, 0
    %s21 = smul.u32 2, %s20
    %p22 = scmp.lt.s32.totalorder %s21, 1
    %s23 = scalar_select %p22, %s21, 1
    %s24 = smul.addr %s23, 4
    %s25 = scalar_lea.vmem %s0, %s24
    %s26 = sadd.s32 0, 0
    %s27 = smul.u32 2, %s26
    %p28 = scmp.lt.s32.totalorder %s27, 1
    %s29 = scalar_select %p28, %s27, 1
    %s30 = smul.addr %s29, 4
    %s31 = scalar_lea.vmem %s0, %s30
    %s32 = sadd.s32 0, 0
    %s33 = smul.u32 2, %s32
    %p34 = scmp.eq.s32.totalorder 0, 0
    // Predicated region
    $region10: #{tpu_custom_call.1} parent=1 // pred_check
      %p35 = pneg %p34
    $region11: #{tpu_custom_call.1} parent=1 // pred_check_branch
      %37 = sbr.rel (%p35) target = $region13
    $region12: #{tpu_custom_call.1} parent=1 // pred_region
      %vm38 = vcmask 17408
      %39 = vst.msk [vmem:[#allocation2] sm:$0x3] %vm38, 0.0
    $region13: #{tpu_custom_call.1} parent=1 // pred_fallthru
      _
    %v40 = vld [vmem:[#allocation2] sm:$0x3]
    %v41 = vld [vmem:[%s31] sm:$0x77]
    %v42 = vld [vmem:[%s31 + $0x8] sm:$0x77]
    %v45 = vcombine.high %v41, %v41
    %v46 = vcombine.high %v42, %v42
    %vm49 = vcmask 1042432
    %v50 = vsel %vm49, %v41, 0.0
    %v51 = vsel %vm49, %v45, 0.0
    %v52 = vadd.f32 %v50, %v51
    %53 = vadd.xlane.f32.xlu0 %v52
    %v54 = vpop.xlane.xlu0 %53
    %v55 = vsel %vm49, %v42, 0.0
    %v56 = vsel %vm49, %v46, 0.0
    %v57 = vadd.f32 %v55, %v56
    %58 = vadd.xlane.f32.xlu0 %v57
    %v59 = vpop.xlane.xlu0 %58
    %v62 = vlaneseq
    %v63 = vand.u32 %v62, 127
    %v64 = vlaneseq
    %v65 = vshrl.u32 %v64, 7
    %v66 = vsub.s32 %v63, %v65
    %v67 = vrot.slane %v54, %v66
    %v68 = vlaneseq
    %v69 = vshrl.u32 %v68, 7
    %v70 = vsub.s32 %v63, %v69
    %v71 = vrot.slane %v59, %v70
    %vm72 = vcmask 1041409
    %v73 = vsel %vm72, %v71, %v67
    %v75 = vadd.f32 %v40, %v73
    %vm76 = vcmask 17408
    %77 = vst.msk [vmem:[#allocation2] sm:$0x3] %vm76, %v75
    // Predicated region
    $region14: #{tpu_custom_call.1} parent=1 // pred_check
      %p78 = pneg %p34
    $region15: #{tpu_custom_call.1} parent=1 // pred_check_branch
      %80 = sbr.rel (%p78) target = $region17
    $region16: #{tpu_custom_call.1} parent=1 // pred_region
      %v81 = vld [vmem:[#allocation2] sm:$0x3]
      %v82 = vmul.f32 %v81, 0.00390625
      %v83 = vld [vmem:[%s1] sm:$0x7]
      %vm84 = vcmask 23552
      %v86 = vsel %vm84, %v82, 0
      %v89 = vsel %vm49, %v83, 0
      %91 = vmatprep.subr.mxu0 0.0
      %92 = vmatpush1.msra.mxu0 0.0
      %93 = vmatprep.subr.mxu0 0.0
      %94 = vmatpush1.msra.mxu0 0.0
      %95 = vmatprep.subr.mxu0 0.0
      %96 = vmatpush1.msra.mxu0 0.0
      %97 = vmatprep.subr.mxu0 0.0
      %98 = vmatpush1.msra.mxu0 0.0
      %99 = vmatprep.subr.mxu0 0.0
      %100 = vmatpush1.msra.mxu0 0.0
      %101 = vmatprep.subr.mxu0 0.0
      %102 = vmatpush1.msra.mxu0 0.0
      %103 = vmatprep.subr.mxu0 0.0
      %104 = vmatpush1.msra.mxu0 0.0
      %105 = vmatprep.subr.mxu0 0.0
      %106 = vmatpush1.msra.mxu0 0.0
      %107 = vmatprep.subr.mxu0 0.0
      %108 = vmatpush1.msra.mxu0 0.0
      %109 = vmatprep.subr.mxu0 0.0
      %110 = vmatpush1.msra.mxu0 0.0
      %111 = vmatprep.subr.mxu0 0.0
      %112 = vmatpush1.msra.mxu0 0.0
      %113 = vmatprep.subr.mxu0 0.0
      %114 = vmatpush1.msra.mxu0 0.0
      %115 = vmatprep.subr.mxu0 0.0
      %116 = vmatpush1.msra.mxu0 0.0
      %117 = vmatprep.subr.mxu0 0.0
      %118 = vmatpush1.msra.mxu0 0.0
      %119 = vmatprep.subr.mxu0 0.0
      %120 = vmatpush1.msra.mxu0 0.0
      %121 = vmatprep.subr.mxu0 0.0
      %122 = vmatpush1.msra.mxu0 %v89
      %123 = vmatprep.subr.mxu0 0.0
      %124 = vmatpush2.msra.mxu0 0.0
      %125 = vmatprep.subr.mxu0 0.0
      %126 = vmatpush2.msra.mxu0 0.0
      %127 = vmatprep.subr.mxu0 0.0
      %128 = vmatpush2.msra.mxu0 0.0
      %129 = vmatprep.subr.mxu0 0.0
      %130 = vmatpush2.msra.mxu0 0.0
      %131 = vmatprep.subr.mxu0 0.0
      %132 = vmatpush2.msra.mxu0 0.0
      %133 = vmatprep.subr.mxu0 0.0
      %134 = vmatpush2.msra.mxu0 0.0
      %135 = vmatprep.subr.mxu0 0.0
      %136 = vmatpush2.msra.mxu0 0.0
      %137 = vmatprep.subr.mxu0 0.0
      %138 = vmatpush2.msra.mxu0 0.0
      %139 = vmatprep.subr.mxu0 0.0
      %140 = vmatpush2.msra.mxu0 0.0
      %141 = vmatprep.subr.mxu0 0.0
      %142 = vmatpush2.msra.mxu0 0.0
      %143 = vmatprep.subr.mxu0 0.0
      %144 = vmatpush2.msra.mxu0 0.0
      %145 = vmatprep.subr.mxu0 0.0
      %146 = vmatpush2.msra.mxu0 0.0
      %147 = vmatprep.subr.mxu0 0.0
      %148 = vmatpush2.msra.mxu0 0.0
      %149 = vmatprep.subr.mxu0 0.0
      %150 = vmatpush2.msra.mxu0 0.0
      %151 = vmatprep.subr.mxu0 0.0
      %152 = vmatpush2.msra.mxu0 0.0
      %153 = vmatprep.subr.mxu0 0.0
      %154 = vmatpush2.msra.mxu0 0.0
      %155 = vmatprep.mubr.f32.mxu0 0.0
      %156 = vmatmul.mubr.f32.gmra.mxu0 %v86
      %v157 = vpop.f32.mrf.mxu0
      %v158 = vadd.f32 0.0, %v157
      %v159 = vpop.f32.mrf.mxu0
      %160 = vdwg.mxu0
      %161 = vst [vmem:[#allocation3] sm:$0x3] %v158
    $region17: #{tpu_custom_call.1} parent=1 // pred_fallthru
      _
    // Predicated region
    $region18: #{tpu_custom_call.1} parent=1 // pred_check
      _
    $region19: #{tpu_custom_call.1} parent=1 // pred_check_branch
      %163 = sbr.rel (0) target = $region21
    $region20: #{tpu_custom_call.1} parent=1 // pred_region
      %s165 = ssub.s32 32, 32
      %166 = vsyncadd [#allocation4], %s165
      %s168 = sshll.u32 [#allocation3], 4
      %s169 = int_to_ptr.vmem [resolvable:$true] %s168
      %171 = dma.vmem_to_hbm [thread:$0]  %s169, 32, %s2, [#allocation4]
    $region21: #{tpu_custom_call.1} parent=1 // pred_fallthru
      _
    // Predicated region
    $region22: #{tpu_custom_call.1} parent=1 // pred_check
      _
    $region23: #{tpu_custom_call.1} parent=1 // pred_check_branch
      %173 = sbr.rel (0) target = $region25
    $region24: #{tpu_custom_call.1} parent=1 // pred_region
      %174 = dma.done [#allocation4], 32
    $region25: #{tpu_custom_call.1} parent=1 // pred_fallthru
      _
    %175 = vsyncpa [#allocation4], 1

</llo_original>
